<compile_context>
chip_gen: v7x
topology: tpu7x:2x2x1
jax: 0.10.0
libtpu: 0.0.40
codegen_flags: <defaults>
</compile_context>

<pallas_src>
import functools

import jax
import jax.numpy as jnp
from jax.experimental import pallas as pl
from jax.experimental.pallas import tpu as pltpu


def _round_up(x, m):
    return ((x + m - 1) // m) * m


def mlp_kernel(x_ref, w1t_ref, w2t_ref, o_ref):
    # x_ref:   (tm, I_p)   bf16 activation tile (pipelined over the grid)
    # w1t_ref: (I_p, H_p)  bf16 transposed linear1 weight (VMEM-resident)
    # w2t_ref: (H_p, O_p)  bf16 transposed linear2 weight (VMEM-resident)
    # o_ref:   (tm, O_p)   output tile (lane-dense: O_p % 128 == 0)
    h = jnp.dot(x_ref[...], w1t_ref[...], preferred_element_type=jnp.float32)
    h = jax.nn.sigmoid(h).astype(w2t_ref.dtype)  # back to bf16 for 2nd MXU pass
    y = jnp.dot(h, w2t_ref[...], preferred_element_type=jnp.float32)
    o_ref[...] = y.astype(o_ref.dtype)


def prepare_params(w1, w2, compute_dtype=jnp.bfloat16):
    """One-time weight prep (keep OUT of the per-call hot path):
    transpose PyTorch (out, in) -> (in, out), zero-pad feature dims to
    multiples of 128 for lane-dense MXU tiles, and cast to bf16.
    Zero padding is exact: padded hidden lanes produce sigmoid(0)=0.5 but the
    matching padded rows of w2t are zero, so they contribute nothing."""
    H, I = w1.shape
    O, _ = w2.shape
    I_p, H_p, O_p = (_round_up(d, 128) for d in (I, H, O))
    w1t = jnp.zeros((I_p, H_p), compute_dtype).at[:I, :H].set(
        jnp.asarray(w1, compute_dtype).T)
    w2t = jnp.zeros((H_p, O_p), compute_dtype).at[:H, :O].set(
        jnp.asarray(w2, compute_dtype).T)
    return w1t, w2t


@functools.partial(jax.jit, static_argnames=("out_features", "block_m"))
def mlp_forward(x, w1t, w2t, *, out_features, block_m=128):
    """x: (B, input_size) float32/bf16; w1t/w2t: padded bf16 from prepare_params."""
    B, I = x.shape
    I_p, H_p = w1t.shape
    H_p2, O_p = w2t.shape
    assert H_p2 == H_p
    compute_dtype = w1t.dtype

    # Batch tile: multiple of 8 (sublane), capped at block_m; pad B up to it.
    tm = min(block_m, _round_up(B, 8))
    B_p = _round_up(B, tm)

    # Pad + cast activations (cheap XLA op, fused by the compiler).
    x_p = jnp.zeros((B_p, I_p), compute_dtype).at[:B, :I].set(
        x.astype(compute_dtype))

    grid = (B_p // tm,)
    out_p = pl.pallas_call(
        mlp_kernel,
        out_shape=jax.ShapeDtypeStruct((B_p, O_p), x.dtype),
        grid_spec=pltpu.PrefetchScalarGridSpec(
            num_scalar_prefetch=0,
            grid=grid,
            in_specs=[
                # activation tile moves with the grid -> pipelined DMA
                pl.BlockSpec((tm, I_p), lambda i: (i, 0)),
                # weights: same block every step -> DMA'd once, VMEM-resident
                pl.BlockSpec((I_p, H_p), lambda i: (0, 0)),
                pl.BlockSpec((H_p, O_p), lambda i: (0, 0)),
            ],
            out_specs=pl.BlockSpec((tm, O_p), lambda i: (i, 0)),
        ),
        compiler_params=pltpu.CompilerParams(
            dimension_semantics=("parallel",),   # shard batch tiles across TCs (v7x)
            vmem_limit_bytes=64 * 1024 * 1024,
        ),
    )(x_p, w1t, w2t)

    # Strip batch / output-feature padding.
    return out_p[:B, :out_features]


def reference_mlp(x, w1, w2):
    # Pure-JAX fp32 reference matching PyTorch semantics exactly.
    return jax.nn.sigmoid(x @ w1.T) @ w2.T


if __name__ == "__main__":
    key = jax.random.PRNGKey(0)
    k_x, k_w1, k_w2 = jax.random.split(key, 3)

    # Small shapes consistent with the module; batch chosen so the grid has
    # >1 step and the batch-padding path is exercised.
    batch = 200
    input_size = 32
    hidden_size = 64
    output_size = 16

    x = jax.random.normal(k_x, (batch, input_size), dtype=jnp.float32)
    # PyTorch nn.Linear layout (out_features, in_features), ~kaiming scale.
    w1 = jax.random.uniform(
        k_w1, (hidden_size, input_size), dtype=jnp.float32,
        minval=-1.0, maxval=1.0) / jnp.sqrt(input_size)
    w2 = jax.random.uniform(
        k_w2, (output_size, hidden_size), dtype=jnp.float32,
        minval=-1.0, maxval=1.0) / jnp.sqrt(hidden_size)

    # One-time weight prep (transpose + 128-pad + bf16) outside the hot path.
    w1t, w2t = prepare_params(w1, w2)

    y = mlp_forward(x, w1t, w2t, out_features=output_size, block_m=128)
    y = jax.block_until_ready(y)

    y_ref = reference_mlp(x, w1, w2)
    assert y.shape == (batch, output_size)
    max_err = float(jnp.max(jnp.abs(y - y_ref)))
    # bf16 MXU inputs with f32 accumulation -> relaxed tolerance vs fp32 ref.
    assert jnp.allclose(y, y_ref, atol=3e-2, rtol=3e-2), (
        f"mismatch vs reference; max abs err = {max_err}")

    print("KERNEL_OK")
</pallas_src>

<mosaic_0001>
module attributes {stable_mosaic.version = 11 : i64} {
  func.func @mlp_kernel(%arg0: i32, %arg1: memref<128x128xbf16, #tpu.memory_space<vmem>>, %arg2: memref<128x128xbf16, #tpu.memory_space<vmem>>, %arg3: memref<128x128xbf16, #tpu.memory_space<vmem>>, %arg4: memref<128x128xf32, #tpu.memory_space<vmem>>) attributes {dimension_semantics = [#tpu.dimension_semantics<parallel>], iteration_bounds = array<i64: 2>, scalar_prefetch = 0 : i64, scratch_operands = 0 : i64, tpu.core_type = #tpu.core_type<tc>, window_params = [{transform_indices = @transform_0, window_bounds = array<i64: 128, 128>}, {pipeline_mode = #tpu.pipeline_mode<synchronous>, transform_indices = @transform_1, window_bounds = array<i64: 128, 128>}, {pipeline_mode = #tpu.pipeline_mode<synchronous>, transform_indices = @transform_2, window_bounds = array<i64: 128, 128>}, {transform_indices = @transform_3, window_bounds = array<i64: 128, 128>}]} {
    %c0 = arith.constant 0 : index
    %c0_0 = arith.constant 0 : index
    %0 = vector.load %arg1[%c0, %c0_0] : memref<128x128xbf16, #tpu.memory_space<vmem>>, vector<128x128xbf16>
    %c0_1 = arith.constant 0 : index
    %c0_2 = arith.constant 0 : index
    %1 = vector.load %arg2[%c0_1, %c0_2] : memref<128x128xbf16, #tpu.memory_space<vmem>>, vector<128x128xbf16>
    %cst = arith.constant dense<0.000000e+00> : vector<128x128xf32>
    %2 = tpu.matmul %0, %1, %cst {dimension_numbers = #tpu.dot_dimension_numbers<[1], [0], [0], [1], [0, 0, 1, 1], [], []>} : vector<128x128xbf16>, vector<128x128xbf16>, vector<128x128xf32> -> vector<128x128xf32>
    %3 = arith.negf %2 : vector<128x128xf32>
    %4 = math.exp %3 : vector<128x128xf32>
    %cst_3 = arith.constant 1.000000e+00 : f32
    %5 = vector.broadcast %cst_3 : f32 to vector<128x128xf32>
    %6 = arith.addf %5, %4 : vector<128x128xf32>
    %7 = arith.divf %5, %6 : vector<128x128xf32>
    %8 = arith.truncf %7 : vector<128x128xf32> to vector<128x128xbf16>
    %c0_4 = arith.constant 0 : index
    %c0_5 = arith.constant 0 : index
    %9 = vector.load %arg3[%c0_4, %c0_5] : memref<128x128xbf16, #tpu.memory_space<vmem>>, vector<128x128xbf16>
    %cst_6 = arith.constant dense<0.000000e+00> : vector<128x128xf32>
    %10 = tpu.matmul %8, %9, %cst_6 {dimension_numbers = #tpu.dot_dimension_numbers<[1], [0], [0], [1], [0, 0, 1, 1], [], []>} : vector<128x128xbf16>, vector<128x128xbf16>, vector<128x128xf32> -> vector<128x128xf32>
    %c0_7 = arith.constant 0 : index
    %c0_8 = arith.constant 0 : index
    %11 = vector.load %arg4[%c0_7, %c0_8] : memref<128x128xf32, #tpu.memory_space<vmem>>, vector<128x128xf32>
    tpu.vector_store %arg4[%c0_7, %c0_8], %10 {strides = array<i32>} : memref<128x128xf32, #tpu.memory_space<vmem>>, vector<128x128xf32>,
    return
  }
  func.func @transform_0(%arg0: i32) -> (i32, i32) {
    %c0_i32 = arith.constant 0 : i32
    %c0_i32_0 = arith.constant 0 : i32
    return %arg0, %c0_i32 : i32, i32
  }
  func.func @transform_1(%arg0: i32) -> (i32, i32) {
    %c0_i32 = arith.constant 0 : i32
    %c0_i32_0 = arith.constant 0 : i32
    %c0_i32_1 = arith.constant 0 : i32
    return %c0_i32, %c0_i32_0 : i32, i32
  }
  func.func @transform_2(%arg0: i32) -> (i32, i32) {
    %c0_i32 = arith.constant 0 : i32
    %c0_i32_0 = arith.constant 0 : i32
    %c0_i32_1 = arith.constant 0 : i32
    return %c0_i32, %c0_i32_0 : i32, i32
  }
  func.func @transform_3(%arg0: i32) -> (i32, i32) {
    %c0_i32 = arith.constant 0 : i32
    %c0_i32_0 = arith.constant 0 : i32
    return %arg0, %c0_i32 : i32, i32
  }
}

</mosaic_0001>

<llo_original>
// kernel: mlp_forward.1
$region0: #{mlp_forward.1}
  #allocation0 [shape = 'u32[]', space=smem, size = 0x4, offset = 0x4, fixed_abs, tag = 'smem constant byte address 0x4 - core index']
  #allocation1 [shape = 'u32[144,128]{1,0:T(1,128)}', space=vmem, size = 0x12000, scoped, tag = 'internal scratch']
  %s0 = inlined_call_operand.hbm [shape: bf16[256,128], index: 0, kind: input, shape index: {}]
  %s1 = inlined_call_operand.hbm [shape: bf16[128,128], index: 1, kind: input, shape index: {}]
  %s2 = inlined_call_operand.hbm [shape: bf16[128,128], index: 2, kind: input, shape index: {}]
  %s3 = inlined_call_operand.hbm [shape: f32[256,128], index: 3, kind: output, shape index: {}]
  %s4 = sld [smem:[#allocation0]]
  $region57: #{mlp_forward.1} parent=0
    _
  %s6 = ssub.s32 1, %s4
  %s7 = scalar_select 0, %s6, %s4
  $region1: #{mlp_forward.1} parent=0
    #allocation2 [shape = 'u8[65536]{0}', space=vmem, size = 0x10000, scoped, tag = 'input window, operand 0']
    #allocation3 [shape = 's32[2]{0}', space=sflag, size = 0x8, scoped, tag = 'scoped memory for mlp_forward.1']
    #allocation4 [shape = 's32[2]{0}', space=sflag, size = 0x8, scoped, tag = 'scoped memory for mlp_forward.1']
    #allocation5 [shape = 'u8[32768]{0}', space=vmem, size = 0x8000, scoped, tag = 'input window, operand 1, single buffered']
    #allocation6 [shape = 's32[1]{0}', space=sflag, size = 0x4, scoped, tag = 'scoped memory for mlp_forward.1']
    #allocation7 [shape = 'u8[32768]{0}', space=vmem, size = 0x8000, scoped, tag = 'input window, operand 2, single buffered']
    #allocation8 [shape = 'u8[131072]{0}', space=vmem, size = 0x20000, scoped, tag = 'output window, operand 0']
    %8 = vsyncpa [#allocation3], 0
    %s9 = scalar_lea.sflag [#allocation3], 1
    %10 = vsyncpa %s9, 0
    %11 = vsyncpa [#allocation6], 0
    %12 = vsyncpa [#allocation4], 0
    %s13 = scalar_lea.sflag [#allocation4], 1
    %14 = vsyncpa %s13, 0
    loop: start=0, step=1, limit=4
    $region2: #{mlp_forward.1} parent=1 // loop_pre_header
      _
    $region3: #{mlp_forward.1} parent=1 // loop_header
      %s16 = sphi 0, %s20
      %p17 = scmp.ge.s32.totalorder %s16, 4
      %s26 = sphi 0, %s28
      %s29 = sphi 0, %s26
      %s30 = sphi 0, %s29
      %s46 = sphi 0, %s30
      %s50 = sphi 0, %s50
      %s52 = sphi 0, %s50
      %s53 = sphi 0, %s52
      %s67 = sphi 0, %s53
      %s71 = sphi 0, %s71
      %s73 = sphi 0, %s71
      %s74 = sphi 0, %s73
      %s88 = sphi 0, %s74
      %s94 = sphi 0, %s96
      %s97 = sphi 0, %s94
      %s98 = sphi 0, %s97
      %s114 = sphi 0, %s98
    $region4: #{mlp_forward.1} parent=1 // loop_header_branch
      %19 = sbr.rel (%p17) target = $region8
    $region5: #{mlp_forward.1} parent=1 // loop_body
      %s21 = ssub.s32 %s16, 1
      %s22 = ssub.s32 %s16, 2
      %s23 = sadd.s32 %s16, 1
      %s24 = ssub.s32 %s16, %s23
      %p25 = scmp.eq.s32.totalorder %s24, 0
      %s27 = sadd.s32 %s26, 1
      %s28 = scalar_select %p25, %s26, %s27
      %p31 = pneg %p25
      %p32 = scmp.eq.s32.totalorder %s16, 1
      %p33 = por %p31, %p32
      %p34 = scmp.ne.s32.totalorder %s26, %s29
      %p35 = scmp.eq.s32.totalorder %s16, 0
      %p36 = por %p34, %p35
      %p37 = scmp.ne.s32.totalorder %s26, %s29
      %p38 = scmp.eq.s32.totalorder %s21, 1
      %p39 = por %p37, %p38
      %p40 = scmp.ne.s32.totalorder %s29, %s30
      %p41 = scmp.eq.s32.totalorder %s21, 0
      %p42 = por %p40, %p41
      %p43 = scmp.ne.s32.totalorder %s29, %s30
      %p44 = scmp.eq.s32.totalorder %s22, 1
      %p45 = por %p43, %p44
      %p47 = scmp.ne.s32.totalorder %s30, %s46
      %p48 = scmp.eq.s32.totalorder %s22, 0
      %p49 = por %p47, %p48
      %s51 = sadd.s32 %s50, 1
      %p54 = scmp.eq.s32.totalorder %s16, 1
      %p55 = scmp.ne.s32.totalorder %s50, %s52
      %p56 = scmp.eq.s32.totalorder %s16, 0
      %p57 = por %p55, %p56
      %p58 = scmp.ne.s32.totalorder %s50, %s52
      %p59 = scmp.eq.s32.totalorder %s21, 1
      %p60 = por %p58, %p59
      %p61 = scmp.ne.s32.totalorder %s52, %s53
      %p62 = scmp.eq.s32.totalorder %s21, 0
      %p63 = por %p61, %p62
      %p64 = scmp.ne.s32.totalorder %s52, %s53
      %p65 = scmp.eq.s32.totalorder %s22, 1
      %p66 = por %p64, %p65
      %p68 = scmp.ne.s32.totalorder %s53, %s67
      %p69 = scmp.eq.s32.totalorder %s22, 0
      %p70 = por %p68, %p69
      %s72 = sadd.s32 %s71, 1
      %p75 = scmp.eq.s32.totalorder %s16, 1
      %p76 = scmp.ne.s32.totalorder %s71, %s73
      %p77 = scmp.eq.s32.totalorder %s16, 0
      %p78 = por %p76, %p77
      %p79 = scmp.ne.s32.totalorder %s71, %s73
      %p80 = scmp.eq.s32.totalorder %s21, 1
      %p81 = por %p79, %p80
      %p82 = scmp.ne.s32.totalorder %s73, %s74
      %p83 = scmp.eq.s32.totalorder %s21, 0
      %p84 = por %p82, %p83
      %p85 = scmp.ne.s32.totalorder %s73, %s74
      %p86 = scmp.eq.s32.totalorder %s22, 1
      %p87 = por %p85, %p86
      %p89 = scmp.ne.s32.totalorder %s74, %s88
      %p90 = scmp.eq.s32.totalorder %s22, 0
      %p91 = por %p89, %p90
      %s92 = ssub.s32 %s16, %s23
      %p93 = scmp.eq.s32.totalorder %s92, 0
      %s95 = sadd.s32 %s94, 1
      %s96 = scalar_select %p93, %s94, %s95
      %p99 = pneg %p93
      %p100 = scmp.eq.s32.totalorder %s16, 1
      %p101 = por %p99, %p100
      %p102 = scmp.ne.s32.totalorder %s94, %s97
      %p103 = scmp.eq.s32.totalorder %s16, 0
      %p104 = por %p102, %p103
      %p105 = scmp.ne.s32.totalorder %s94, %s97
      %p106 = scmp.eq.s32.totalorder %s21, 1
      %p107 = por %p105, %p106
      %p108 = scmp.ne.s32.totalorder %s97, %s98
      %p109 = scmp.eq.s32.totalorder %s21, 0
      %p110 = por %p108, %p109
      %p111 = scmp.ne.s32.totalorder %s97, %s98
      %p112 = scmp.eq.s32.totalorder %s22, 1
      %p113 = por %p111, %p112
      %p115 = scmp.ne.s32.totalorder %s98, %s114
      %p116 = scmp.eq.s32.totalorder %s22, 0
      %p117 = por %p115, %p116
      %p118 = scmp.le.s32.totalorder 1, %s16
      %p119 = scmp.lt.s32.totalorder %s16, 3
      %p120 = pnand %p118, %p119
      %p121 = pneg %p120
      // Predicated region
      $region9: #{mlp_forward.1} parent=5 // pred_check
        _
      $region10: #{mlp_forward.1} parent=5 // pred_check_branch
        %123 = sbr.rel (%p120) target = $region12
      $region11: #{mlp_forward.1} parent=5 // pred_region
        %s124 = ssub.s32 %s16, 1
        // Predicated region
        $region13: #{mlp_forward.1} parent=11 // pred_check
          %p125 = pneg %p63
        $region14: #{mlp_forward.1} parent=11 // pred_check_branch
          %127 = sbr.rel (%p125) target = $region16
        $region15: #{mlp_forward.1} parent=11 // pred_region
          %s129 = ssub.s32 1024, 1024
          %130 = vsyncadd [#allocation6], %s129
          %s131 = sshll.u32 [#allocation5], 4
          %s132 = int_to_ptr.vmem [resolvable:$true] %s131
          %137 = dma.hbm_to_vmem [thread:$0]  %s1, 1024, %s132, [#allocation6], 64, 64, 4
        $region16: #{mlp_forward.1} parent=11 // pred_fallthru
          _
        // Predicated region
        $region17: #{mlp_forward.1} parent=11 // pred_check
          %p138 = pneg %p84
        $region18: #{mlp_forward.1} parent=11 // pred_check_branch
          %140 = sbr.rel (%p138) target = $region20
        $region19: #{mlp_forward.1} parent=11 // pred_region
          %s142 = ssub.s32 1024, 1024
          %143 = vsyncadd [#allocation6], %s142
          %s144 = sshll.u32 [#allocation7], 4
          %s145 = int_to_ptr.vmem [resolvable:$true] %s144
          %150 = dma.hbm_to_vmem [thread:$0]  %s2, 1024, %s145, [#allocation6], 64, 64, 4
        $region20: #{mlp_forward.1} parent=11 // pred_fallthru
          _
      $region12: #{mlp_forward.1} parent=5 // pred_fallthru
        _
      %p151 = scmp.lt.s32.totalorder %s16, 2
      // Predicated region
      $region21: #{mlp_forward.1} parent=5 // pred_check
        %p152 = pneg %p151
      $region22: #{mlp_forward.1} parent=5 // pred_check_branch
        %154 = sbr.rel (%p152) target = $region24
      $region23: #{mlp_forward.1} parent=5 // pred_region
        // Predicated region
        $region25: #{mlp_forward.1} parent=23 // pred_check
          %p155 = pneg %p36
        $region26: #{mlp_forward.1} parent=23 // pred_check_branch
          %157 = sbr.rel (%p155) target = $region28
        $region27: #{mlp_forward.1} parent=23 // pred_region
          %s158 = sand.u32 %s26, 1
          %s159 = scalar_lea.sflag [#allocation3], %s158
          %s160 = sand.u32 %s26, 1
          %s161 = smul.addr %s160, 64
          %s162 = scalar_lea.vmem [#allocation2], %s161
          %s163 = smul.u32 16, %s16
          %s165 = ssub.s32 1024, 1024
          %166 = vsyncadd %s159, %s165
          %s167 = smul.addr %s163, 64
          %s168 = scalar_lea.hbm %s0, %s167
          %s169 = sshll.u32 %s162, 4
          %s170 = int_to_ptr.vmem [resolvable:$true] %s169
          %175 = dma.hbm_to_vmem [thread:$0]  %s168, 1024, %s170, %s159, 64, 64, 4
        $region28: #{mlp_forward.1} parent=23 // pred_fallthru
          _
      $region24: #{mlp_forward.1} parent=5 // pred_fallthru
        _
      %p176 = scmp.le.s32.totalorder 1, %s16
      %p177 = scmp.lt.s32.totalorder %s16, 3
      %p178 = pnand %p176, %p177
      %p179 = pneg %p178
      // Predicated region
      $region29: #{mlp_forward.1} parent=5 // pred_check
        _
      $region30: #{mlp_forward.1} parent=5 // pred_check_branch
        %181 = sbr.rel (%p178) target = $region32
      $region31: #{mlp_forward.1} parent=5 // pred_region
        %s182 = ssub.s32 %s16, 1
        %s183 = sand.u32 %s29, 1
        %s184 = scalar_lea.sflag [#allocation3], %s183
        %s185 = sand.u32 %s29, 1
        %s186 = smul.addr %s185, 64
        %s187 = scalar_lea.vmem [#allocation2], %s186
        // Predicated region
        $region33: #{mlp_forward.1} parent=31 // pred_check
          %p188 = pneg %p42
        $region34: #{mlp_forward.1} parent=31 // pred_check_branch
          %190 = sbr.rel (%p188) target = $region36
        $region35: #{mlp_forward.1} parent=31 // pred_region
          %191 = dma.done %s184, 1024
        $region36: #{mlp_forward.1} parent=31 // pred_fallthru
          _
        // Predicated region
        $region37: #{mlp_forward.1} parent=31 // pred_check
          %p192 = pneg %p63
        $region38: #{mlp_forward.1} parent=31 // pred_check_branch
          %194 = sbr.rel (%p192) target = $region40
        $region39: #{mlp_forward.1} parent=31 // pred_region
          %195 = dma.done [#allocation6], 1024
        $region40: #{mlp_forward.1} parent=31 // pred_fallthru
          _
        // Predicated region
        $region41: #{mlp_forward.1} parent=31 // pred_check
          %p196 = pneg %p84
        $region42: #{mlp_forward.1} parent=31 // pred_check_branch
          %198 = sbr.rel (%p196) target = $region44
        $region43: #{mlp_forward.1} parent=31 // pred_region
          %199 = dma.done [#allocation6], 1024
        $region44: #{mlp_forward.1} parent=31 // pred_fallthru
          _
        %s200 = sand.u32 %s29, 1
        %s201 = scalar_lea.sflag [#allocation3], %s200
        %s202 = sand.u32 %s29, 1
        %s203 = smul.addr %s202, 64
        %s204 = scalar_lea.vmem [#allocation2], %s203
        %p205 = pneg %p42
        %p206 = pneg %p39
        %p207 = pneg %p63
        %p208 = pneg %p60
        %p209 = pneg %p84
        %p210 = pneg %p81
        %p211 = pneg %p110
        %p212 = pneg %p107
        %s213 = sand.u32 %s97, 1
        %s214 = scalar_lea.sflag [#allocation4], %s213
        %s215 = sand.u32 %s97, 1
        %s216 = smul.addr %s215, 128
        %s217 = scalar_lea.vmem [#allocation8], %s216
        %s218 = smul.u32 16, %s21
        %s219 = smul.u32 16, %s21
        %v221 = vld [vmem:[%s187] sm:$0xf]
        %v222 = vld [vmem:[%s187 + $0x4] sm:$0xf]
        %v223 = vld [vmem:[%s187 + $0x8] sm:$0xf]
        %v224 = vld [vmem:[%s187 + $0xc] sm:$0xf]
        %v225 = vld [vmem:[%s187 + $0x10] sm:$0xf]
        %v226 = vld [vmem:[%s187 + $0x14] sm:$0xf]
        %v227 = vld [vmem:[%s187 + $0x18] sm:$0xf]
        %v228 = vld [vmem:[%s187 + $0x1c] sm:$0xf]
        %v229 = vld [vmem:[%s187 + $0x20] sm:$0xf]
        %v230 = vld [vmem:[%s187 + $0x24] sm:$0xf]
        %v231 = vld [vmem:[%s187 + $0x28] sm:$0xf]
        %v232 = vld [vmem:[%s187 + $0x2c] sm:$0xf]
        %v233 = vld [vmem:[%s187 + $0x30] sm:$0xf]
        %v234 = vld [vmem:[%s187 + $0x34] sm:$0xf]
        %v235 = vld [vmem:[%s187 + $0x38] sm:$0xf]
        %v236 = vld [vmem:[%s187 + $0x3c] sm:$0xf]
        %v237 = vld [vmem:[#allocation5] sm:$0xf]
        %v238 = vld [vmem:[#allocation5 + $0x4] sm:$0xf]
        %v239 = vld [vmem:[#allocation5 + $0x8] sm:$0xf]
        %v240 = vld [vmem:[#allocation5 + $0xc] sm:$0xf]
        %v241 = vld [vmem:[#allocation5 + $0x10] sm:$0xf]
        %v242 = vld [vmem:[#allocation5 + $0x14] sm:$0xf]
        %v243 = vld [vmem:[#allocation5 + $0x18] sm:$0xf]
        %v244 = vld [vmem:[#allocation5 + $0x1c] sm:$0xf]
        %v245 = vld [vmem:[#allocation5 + $0x20] sm:$0xf]
        %v246 = vld [vmem:[#allocation5 + $0x24] sm:$0xf]
        %v247 = vld [vmem:[#allocation5 + $0x28] sm:$0xf]
        %v248 = vld [vmem:[#allocation5 + $0x2c] sm:$0xf]
        %v249 = vld [vmem:[#allocation5 + $0x30] sm:$0xf]
        %v250 = vld [vmem:[#allocation5 + $0x34] sm:$0xf]
        %v251 = vld [vmem:[#allocation5 + $0x38] sm:$0xf]
        %v252 = vld [vmem:[#allocation5 + $0x3c] sm:$0xf]
        %v269 = vunpack.c.l.b16 %v221
        %v270 = vunpack.c.l.b16 %v222
        %v271 = vunpack.c.l.b16 %v223
        %v272 = vunpack.c.l.b16 %v224
        %v273 = vunpack.c.l.b16 %v225
        %v274 = vunpack.c.l.b16 %v226
        %v275 = vunpack.c.l.b16 %v227
        %v276 = vunpack.c.l.b16 %v228
        %v277 = vunpack.c.l.b16 %v229
        %v278 = vunpack.c.l.b16 %v230
        %v279 = vunpack.c.l.b16 %v231
        %v280 = vunpack.c.l.b16 %v232
        %v281 = vunpack.c.l.b16 %v233
        %v282 = vunpack.c.l.b16 %v234
        %v283 = vunpack.c.l.b16 %v235
        %v284 = vunpack.c.l.b16 %v236
        %v285 = vpack.c.b16 %v270, %v269
        %v286 = vpack.c.b16 %v272, %v271
        %v287 = vpack.c.b16 %v274, %v273
        %v288 = vpack.c.b16 %v276, %v275
        %v289 = vpack.c.b16 %v278, %v277
        %v290 = vpack.c.b16 %v280, %v279
        %v291 = vpack.c.b16 %v282, %v281
        %v292 = vpack.c.b16 %v284, %v283
        %v317 = vunpack.c.l.b16 %v237
        %v318 = vunpack.c.l.b16 %v238
        %v319 = vunpack.c.l.b16 %v239
        %v320 = vunpack.c.l.b16 %v240
        %v321 = vunpack.c.l.b16 %v241
        %v322 = vunpack.c.l.b16 %v242
        %v323 = vunpack.c.l.b16 %v243
        %v324 = vunpack.c.l.b16 %v244
        %v325 = vunpack.c.l.b16 %v245
        %v326 = vunpack.c.l.b16 %v246
        %v327 = vunpack.c.l.b16 %v247
        %v328 = vunpack.c.l.b16 %v248
        %v329 = vunpack.c.l.b16 %v249
        %v330 = vunpack.c.l.b16 %v250
        %v331 = vunpack.c.l.b16 %v251
        %v332 = vunpack.c.l.b16 %v252
        %v333 = vpack.c.b16 %v318, %v317
        %v334 = vpack.c.b16 %v320, %v319
        %v335 = vpack.c.b16 %v322, %v321
        %v336 = vpack.c.b16 %v324, %v323
        %v337 = vpack.c.b16 %v326, %v325
        %v338 = vpack.c.b16 %v328, %v327
        %v339 = vpack.c.b16 %v330, %v329
        %v340 = vpack.c.b16 %v332, %v331
        %349 = vmatprep.subr.bf16.mxu0 0
        %350 = vmatpush1.bf16.msra.mxu0 %v333
        %351 = vmatprep.subr.bf16.mxu0 0
        %352 = vmatpush1.bf16.msra.mxu0 %v334
        %353 = vmatprep.subr.bf16.mxu0 0
        %354 = vmatpush1.bf16.msra.mxu0 %v335
        %355 = vmatprep.subr.bf16.mxu0 0
        %356 = vmatpush1.bf16.msra.mxu0 %v336
        %357 = vmatprep.subr.bf16.mxu0 0
        %358 = vmatpush1.bf16.msra.mxu0 %v337
        %359 = vmatprep.subr.bf16.mxu0 0
        %360 = vmatpush1.bf16.msra.mxu0 %v338
        %361 = vmatprep.subr.bf16.mxu0 0
        %362 = vmatpush1.bf16.msra.mxu0 %v339
        %363 = vmatprep.subr.bf16.mxu0 0
        %364 = vmatpush1.bf16.msra.mxu0 %v340
        %365 = vmatprep.subr.bf16.mxu0 0
        %366 = vmatpush1.bf16.msra.mxu0 0
        %367 = vmatprep.subr.bf16.mxu0 0
        %368 = vmatpush1.bf16.msra.mxu0 0
        %369 = vmatprep.subr.bf16.mxu0 0
        %370 = vmatpush1.bf16.msra.mxu0 0
        %371 = vmatprep.subr.bf16.mxu0 0
        %372 = vmatpush1.bf16.msra.mxu0 0
        %373 = vmatprep.subr.bf16.mxu0 0
        %374 = vmatpush1.bf16.msra.mxu0 0
        %375 = vmatprep.subr.bf16.mxu0 0
        %376 = vmatpush1.bf16.msra.mxu0 0
        %377 = vmatprep.subr.bf16.mxu0 0
        %378 = vmatpush1.bf16.msra.mxu0 0
        %379 = vmatprep.subr.bf16.mxu0 0
        %380 = vmatpush1.bf16.msra.mxu0 0
        %381 = vmatprep.mubr.bf16.mxu0 0
        %382 = vmatmul.mubr.bf16.gmra.mrb[0].mxu0 %v285
        %v383 = vpop.f32.mrb[0].mxu0
        %v384 = vadd.f32 0.0, %v383
        %v385 = vpop.f32.mrb[0].mxu0
        %v386 = vpop.f32.mrb[0].mxu0
        %v387 = vadd.f32 0.0, %v386
        %v388 = vpop.f32.mrb[0].mxu0
        %389 = vmatprep.mubr.bf16.mxu0 0
        %390 = vmatmul.mubr.bf16.gmra.mrb[0].mxu0 %v286
        %v391 = vpop.f32.mrb[0].mxu0
        %v392 = vadd.f32 0.0, %v391
        %v393 = vpop.f32.mrb[0].mxu0
        %v394 = vpop.f32.mrb[0].mxu0
        %v395 = vadd.f32 0.0, %v394
        %v396 = vpop.f32.mrb[0].mxu0
        %397 = vmatprep.mubr.bf16.mxu0 0
        %398 = vmatmul.mubr.bf16.gmra.mrb[0].mxu0 %v287
        %v399 = vpop.f32.mrb[0].mxu0
        %v400 = vadd.f32 0.0, %v399
        %v401 = vpop.f32.mrb[0].mxu0
        %v402 = vpop.f32.mrb[0].mxu0
        %v403 = vadd.f32 0.0, %v402
        %v404 = vpop.f32.mrb[0].mxu0
        %405 = vmatprep.mubr.bf16.mxu0 0
        %406 = vmatmul.mubr.bf16.gmra.mrb[0].mxu0 %v288
        %v407 = vpop.f32.mrb[0].mxu0
        %v408 = vadd.f32 0.0, %v407
        %v409 = vpop.f32.mrb[0].mxu0
        %v410 = vpop.f32.mrb[0].mxu0
        %v411 = vadd.f32 0.0, %v410
        %v412 = vpop.f32.mrb[0].mxu0
        %413 = vmatprep.mubr.bf16.mxu0 0
        %414 = vmatmul.mubr.bf16.gmra.mrb[0].mxu0 %v289
        %v415 = vpop.f32.mrb[0].mxu0
        %v416 = vadd.f32 0.0, %v415
        %v417 = vpop.f32.mrb[0].mxu0
        %v418 = vpop.f32.mrb[0].mxu0
        %v419 = vadd.f32 0.0, %v418
        %v420 = vpop.f32.mrb[0].mxu0
        %421 = vmatprep.mubr.bf16.mxu0 0
        %422 = vmatmul.mubr.bf16.gmra.mrb[0].mxu0 %v290
        %v423 = vpop.f32.mrb[0].mxu0
        %v424 = vadd.f32 0.0, %v423
        %v425 = vpop.f32.mrb[0].mxu0
        %v426 = vpop.f32.mrb[0].mxu0
        %v427 = vadd.f32 0.0, %v426
        %v428 = vpop.f32.mrb[0].mxu0
        %429 = vmatprep.mubr.bf16.mxu0 0
        %430 = vmatmul.mubr.bf16.gmra.mrb[0].mxu0 %v291
        %v431 = vpop.f32.mrb[0].mxu0
        %v432 = vadd.f32 0.0, %v431
        %v433 = vpop.f32.mrb[0].mxu0
        %v434 = vpop.f32.mrb[0].mxu0
        %v435 = vadd.f32 0.0, %v434
        %v436 = vpop.f32.mrb[0].mxu0
        %437 = vmatprep.mubr.bf16.mxu0 0
        %438 = vmatmul.mubr.bf16.gmra.mrb[0].mxu0 %v292
        %v439 = vpop.f32.mrb[0].mxu0
        %v440 = vadd.f32 0.0, %v439
        %v441 = vpop.f32.mrb[0].mxu0
        %v442 = vpop.f32.mrb[0].mxu0
        %v443 = vadd.f32 0.0, %v442
        %v444 = vpop.f32.mrb[0].mxu0
        %445 = vdwg.mxu0
        %v446 = vxor.u32 %v384, 2147483648
        %v447 = vxor.u32 %v387, 2147483648
        %v448 = vxor.u32 %v392, 2147483648
        %v449 = vxor.u32 %v395, 2147483648
        %v450 = vxor.u32 %v400, 2147483648
        %v451 = vxor.u32 %v403, 2147483648
        %v452 = vxor.u32 %v408, 2147483648
        %v453 = vxor.u32 %v411, 2147483648
        %v454 = vxor.u32 %v416, 2147483648
        %v455 = vxor.u32 %v419, 2147483648
        %v456 = vxor.u32 %v424, 2147483648
        %v457 = vxor.u32 %v427, 2147483648
        %v458 = vxor.u32 %v432, 2147483648
        %v459 = vxor.u32 %v435, 2147483648
        %v460 = vxor.u32 %v440, 2147483648
        %v461 = vxor.u32 %v443, 2147483648
        %v462 = vmul.f32 %v446, 1.442695
        %v463 = vpow.pop %v462
        %v464 = vmul.f32 %v447, 1.442695
        %v465 = vpow.pop %v464
        %v466 = vmul.f32 %v448, 1.442695
        %v467 = vpow.pop %v466
        %v468 = vmul.f32 %v449, 1.442695
        %v469 = vpow.pop %v468
        %v470 = vmul.f32 %v450, 1.442695
        %v471 = vpow.pop %v470
        %v472 = vmul.f32 %v451, 1.442695
        %v473 = vpow.pop %v472
        %v474 = vmul.f32 %v452, 1.442695
        %v475 = vpow.pop %v474
        %v476 = vmul.f32 %v453, 1.442695
        %v477 = vpow.pop %v476
        %v478 = vmul.f32 %v454, 1.442695
        %v479 = vpow.pop %v478
        %v480 = vmul.f32 %v455, 1.442695
        %v481 = vpow.pop %v480
        %v482 = vmul.f32 %v456, 1.442695
        %v483 = vpow.pop %v482
        %v484 = vmul.f32 %v457, 1.442695
        %v485 = vpow.pop %v484
        %v486 = vmul.f32 %v458, 1.442695
        %v487 = vpow.pop %v486
        %v488 = vmul.f32 %v459, 1.442695
        %v489 = vpow.pop %v488
        %v490 = vmul.f32 %v460, 1.442695
        %v491 = vpow.pop %v490
        %v492 = vmul.f32 %v461, 1.442695
        %v493 = vpow.pop %v492
        %v494 = vadd.f32 %v463, 1.0
        %v495 = vadd.f32 %v465, 1.0
        %v496 = vadd.f32 %v467, 1.0
        %v497 = vadd.f32 %v469, 1.0
        %v498 = vadd.f32 %v471, 1.0
        %v499 = vadd.f32 %v473, 1.0
        %v500 = vadd.f32 %v475, 1.0
        %v501 = vadd.f32 %v477, 1.0
        %v502 = vadd.f32 %v479, 1.0
        %v503 = vadd.f32 %v481, 1.0
        %v504 = vadd.f32 %v483, 1.0
        %v505 = vadd.f32 %v485, 1.0
        %v506 = vadd.f32 %v487, 1.0
        %v507 = vadd.f32 %v489, 1.0
        %v508 = vadd.f32 %v491, 1.0
        %v509 = vadd.f32 %v493, 1.0
        %v510 = vrcp.pop %v494
        %v511 = vmul.f32 1.0, %v510
        %v512 = vrcp.pop %v495
        %v513 = vmul.f32 1.0, %v512
        %v514 = vrcp.pop %v496
        %v515 = vmul.f32 1.0, %v514
        %v516 = vrcp.pop %v497
        %v517 = vmul.f32 1.0, %v516
        %v518 = vrcp.pop %v498
        %v519 = vmul.f32 1.0, %v518
        %v520 = vrcp.pop %v499
        %v521 = vmul.f32 1.0, %v520
        %v522 = vrcp.pop %v500
        %v523 = vmul.f32 1.0, %v522
        %v524 = vrcp.pop %v501
        %v525 = vmul.f32 1.0, %v524
        %v526 = vrcp.pop %v502
        %v527 = vmul.f32 1.0, %v526
        %v528 = vrcp.pop %v503
        %v529 = vmul.f32 1.0, %v528
        %v530 = vrcp.pop %v504
        %v531 = vmul.f32 1.0, %v530
        %v532 = vrcp.pop %v505
        %v533 = vmul.f32 1.0, %v532
        %v534 = vrcp.pop %v506
        %v535 = vmul.f32 1.0, %v534
        %v536 = vrcp.pop %v507
        %v537 = vmul.f32 1.0, %v536
        %v538 = vrcp.pop %v508
        %v539 = vmul.f32 1.0, %v538
        %v540 = vrcp.pop %v509
        %v541 = vmul.f32 1.0, %v540
        %v542 = vpack.c.bf16 %v513, %v511
        %v543 = vpack.c.bf16 %v517, %v515
        %v544 = vpack.c.bf16 %v521, %v519
        %v545 = vpack.c.bf16 %v525, %v523
        %v546 = vpack.c.bf16 %v529, %v527
        %v547 = vpack.c.bf16 %v533, %v531
        %v548 = vpack.c.bf16 %v537, %v535
        %v549 = vpack.c.bf16 %v541, %v539
        %v550 = vld [vmem:[#allocation7] sm:$0xf]
        %v551 = vld [vmem:[#allocation7 + $0x4] sm:$0xf]
        %v552 = vld [vmem:[#allocation7 + $0x8] sm:$0xf]
        %v553 = vld [vmem:[#allocation7 + $0xc] sm:$0xf]
        %v554 = vld [vmem:[#allocation7 + $0x10] sm:$0xf]
        %v555 = vld [vmem:[#allocation7 + $0x14] sm:$0xf]
        %v556 = vld [vmem:[#allocation7 + $0x18] sm:$0xf]
        %v557 = vld [vmem:[#allocation7 + $0x1c] sm:$0xf]
        %v558 = vld [vmem:[#allocation7 + $0x20] sm:$0xf]
        %v559 = vld [vmem:[#allocation7 + $0x24] sm:$0xf]
        %v560 = vld [vmem:[#allocation7 + $0x28] sm:$0xf]
        %v561 = vld [vmem:[#allocation7 + $0x2c] sm:$0xf]
        %v562 = vld [vmem:[#allocation7 + $0x30] sm:$0xf]
        %v563 = vld [vmem:[#allocation7 + $0x34] sm:$0xf]
        %v564 = vld [vmem:[#allocation7 + $0x38] sm:$0xf]
        %v565 = vld [vmem:[#allocation7 + $0x3c] sm:$0xf]
        %v582 = vunpack.c.l.b16 %v550
        %v583 = vunpack.c.l.b16 %v551
        %v584 = vunpack.c.l.b16 %v552
        %v585 = vunpack.c.l.b16 %v553
        %v586 = vunpack.c.l.b16 %v554
        %v587 = vunpack.c.l.b16 %v555
        %v588 = vunpack.c.l.b16 %v556
        %v589 = vunpack.c.l.b16 %v557
        %v590 = vunpack.c.l.b16 %v558
        %v591 = vunpack.c.l.b16 %v559
        %v592 = vunpack.c.l.b16 %v560
        %v593 = vunpack.c.l.b16 %v561
        %v594 = vunpack.c.l.b16 %v562
        %v595 = vunpack.c.l.b16 %v563
        %v596 = vunpack.c.l.b16 %v564
        %v597 = vunpack.c.l.b16 %v565
        %v598 = vpack.c.b16 %v583, %v582
        %v599 = vpack.c.b16 %v585, %v584
        %v600 = vpack.c.b16 %v587, %v586
        %v601 = vpack.c.b16 %v589, %v588
        %v602 = vpack.c.b16 %v591, %v590
        %v603 = vpack.c.b16 %v593, %v592
        %v604 = vpack.c.b16 %v595, %v594
        %v605 = vpack.c.b16 %v597, %v596
        %614 = vmatprep.subr.bf16.mxu0 0
        %615 = vmatpush1.bf16.msra.mxu0 %v598
        %616 = vmatprep.subr.bf16.mxu0 0
        %617 = vmatpush1.bf16.msra.mxu0 %v599
        %618 = vmatprep.subr.bf16.mxu0 0
        %619 = vmatpush1.bf16.msra.mxu0 %v600
        %620 = vmatprep.subr.bf16.mxu0 0
        %621 = vmatpush1.bf16.msra.mxu0 %v601
        %622 = vmatprep.subr.bf16.mxu0 0
        %623 = vmatpush1.bf16.msra.mxu0 %v602
        %624 = vmatprep.subr.bf16.mxu0 0
        %625 = vmatpush1.bf16.msra.mxu0 %v603
        %626 = vmatprep.subr.bf16.mxu0 0
        %627 = vmatpush1.bf16.msra.mxu0 %v604
        %628 = vmatprep.subr.bf16.mxu0 0
        %629 = vmatpush1.bf16.msra.mxu0 %v605
        %630 = vmatprep.subr.bf16.mxu0 0
        %631 = vmatpush1.bf16.msra.mxu0 0
        %632 = vmatprep.subr.bf16.mxu0 0
        %633 = vmatpush1.bf16.msra.mxu0 0
        %634 = vmatprep.subr.bf16.mxu0 0
        %635 = vmatpush1.bf16.msra.mxu0 0
        %636 = vmatprep.subr.bf16.mxu0 0
        %637 = vmatpush1.bf16.msra.mxu0 0
        %638 = vmatprep.subr.bf16.mxu0 0
        %639 = vmatpush1.bf16.msra.mxu0 0
        %640 = vmatprep.subr.bf16.mxu0 0
        %641 = vmatpush1.bf16.msra.mxu0 0
        %642 = vmatprep.subr.bf16.mxu0 0
        %643 = vmatpush1.bf16.msra.mxu0 0
        %644 = vmatprep.subr.bf16.mxu0 0
        %645 = vmatpush1.bf16.msra.mxu0 0
        %646 = vmatprep.mubr.bf16.mxu0 0
        %647 = vmatmul.mubr.bf16.gmra.mrb[0].mxu0 %v542
        %v648 = vpop.f32.mrb[0].mxu0
        %v649 = vadd.f32 0.0, %v648
        %v650 = vpop.f32.mrb[0].mxu0
        %v651 = vpop.f32.mrb[0].mxu0
        %v652 = vadd.f32 0.0, %v651
        %v653 = vpop.f32.mrb[0].mxu0
        %654 = vmatprep.mubr.bf16.mxu0 0
        %655 = vmatmul.mubr.bf16.gmra.mrb[0].mxu0 %v543
        %v656 = vpop.f32.mrb[0].mxu0
        %v657 = vadd.f32 0.0, %v656
        %v658 = vpop.f32.mrb[0].mxu0
        %v659 = vpop.f32.mrb[0].mxu0
        %v660 = vadd.f32 0.0, %v659
        %v661 = vpop.f32.mrb[0].mxu0
        %662 = vmatprep.mubr.bf16.mxu0 0
        %663 = vmatmul.mubr.bf16.gmra.mrb[0].mxu0 %v544
        %v664 = vpop.f32.mrb[0].mxu0
        %v665 = vadd.f32 0.0, %v664
        %v666 = vpop.f32.mrb[0].mxu0
        %v667 = vpop.f32.mrb[0].mxu0
        %v668 = vadd.f32 0.0, %v667
        %v669 = vpop.f32.mrb[0].mxu0
        %670 = vmatprep.mubr.bf16.mxu0 0
        %671 = vmatmul.mubr.bf16.gmra.mrb[0].mxu0 %v545
        %v672 = vpop.f32.mrb[0].mxu0
        %v673 = vadd.f32 0.0, %v672
        %v674 = vpop.f32.mrb[0].mxu0
        %v675 = vpop.f32.mrb[0].mxu0
        %v676 = vadd.f32 0.0, %v675
        %v677 = vpop.f32.mrb[0].mxu0
        %678 = vmatprep.mubr.bf16.mxu0 0
        %679 = vmatmul.mubr.bf16.gmra.mrb[0].mxu0 %v546
        %v680 = vpop.f32.mrb[0].mxu0
        %v681 = vadd.f32 0.0, %v680
        %v682 = vpop.f32.mrb[0].mxu0
        %v683 = vpop.f32.mrb[0].mxu0
        %v684 = vadd.f32 0.0, %v683
        %v685 = vpop.f32.mrb[0].mxu0
        %686 = vmatprep.mubr.bf16.mxu0 0
        %687 = vmatmul.mubr.bf16.gmra.mrb[0].mxu0 %v547
        %v688 = vpop.f32.mrb[0].mxu0
        %v689 = vadd.f32 0.0, %v688
        %v690 = vpop.f32.mrb[0].mxu0
        %v691 = vpop.f32.mrb[0].mxu0
        %v692 = vadd.f32 0.0, %v691
        %v693 = vpop.f32.mrb[0].mxu0
        %694 = vmatprep.mubr.bf16.mxu0 0
        %695 = vmatmul.mubr.bf16.gmra.mrb[0].mxu0 %v548
        %v696 = vpop.f32.mrb[0].mxu0
        %v697 = vadd.f32 0.0, %v696
        %v698 = vpop.f32.mrb[0].mxu0
        %v699 = vpop.f32.mrb[0].mxu0
        %v700 = vadd.f32 0.0, %v699
        %v701 = vpop.f32.mrb[0].mxu0
        %702 = vmatprep.mubr.bf16.mxu0 0
        %703 = vmatmul.mubr.bf16.gmra.mrb[0].mxu0 %v549
        %v704 = vpop.f32.mrb[0].mxu0
        %v705 = vadd.f32 0.0, %v704
        %v706 = vpop.f32.mrb[0].mxu0
        %v707 = vpop.f32.mrb[0].mxu0
        %v708 = vadd.f32 0.0, %v707
        %v709 = vpop.f32.mrb[0].mxu0
        %710 = vdwg.mxu0
        %711 = vst [vmem:[%s217] sm:$0xff] %v649
        %712 = vst [vmem:[%s217 + $0x8] sm:$0xff] %v652
        %713 = vst [vmem:[%s217 + $0x10] sm:$0xff] %v657
        %714 = vst [vmem:[%s217 + $0x18] sm:$0xff] %v660
        %715 = vst [vmem:[%s217 + $0x20] sm:$0xff] %v665
        %716 = vst [vmem:[%s217 + $0x28] sm:$0xff] %v668
        %717 = vst [vmem:[%s217 + $0x30] sm:$0xff] %v673
        %718 = vst [vmem:[%s217 + $0x38] sm:$0xff] %v676
        %719 = vst [vmem:[%s217 + $0x40] sm:$0xff] %v681
        %720 = vst [vmem:[%s217 + $0x48] sm:$0xff] %v684
        %721 = vst [vmem:[%s217 + $0x50] sm:$0xff] %v689
        %722 = vst [vmem:[%s217 + $0x58] sm:$0xff] %v692
        %723 = vst [vmem:[%s217 + $0x60] sm:$0xff] %v697
        %724 = vst [vmem:[%s217 + $0x68] sm:$0xff] %v700
        %725 = vst [vmem:[%s217 + $0x70] sm:$0xff] %v705
        %726 = vst [vmem:[%s217 + $0x78] sm:$0xff] %v708
        %s727 = sand.u32 %s97, 1
        %s728 = scalar_lea.sflag [#allocation4], %s727
        %s729 = sand.u32 %s97, 1
        %s730 = smul.addr %s729, 128
        %s731 = scalar_lea.vmem [#allocation8], %s730
        // Predicated region
        $region45: #{mlp_forward.1} parent=31 // pred_check
          %p732 = pneg %p107
        $region46: #{mlp_forward.1} parent=31 // pred_check_branch
          %734 = sbr.rel (%p732) target = $region48
        $region47: #{mlp_forward.1} parent=31 // pred_region
          %s735 = smul.u32 16, %s21
          %s737 = ssub.s32 2048, 2048
          %738 = vsyncadd %s728, %s737
          %s739 = smul.addr %s735, 128
          %s740 = scalar_lea.hbm %s3, %s739
          %s741 = sshll.u32 %s731, 4
          %s742 = int_to_ptr.vmem [resolvable:$true] %s741
          %747 = dma.vmem_to_hbm [thread:$0]  %s742, 2048, %s740, %s728, 128, 128, 8
        $region48: #{mlp_forward.1} parent=31 // pred_fallthru
          _
      $region32: #{mlp_forward.1} parent=5 // pred_fallthru
        _
      %p748 = scmp.le.s32.totalorder 2, %s16
      // Predicated region
      $region49: #{mlp_forward.1} parent=5 // pred_check
        %p749 = pneg %p748
      $region50: #{mlp_forward.1} parent=5 // pred_check_branch
        %751 = sbr.rel (%p749) target = $region52
      $region51: #{mlp_forward.1} parent=5 // pred_region
        %s752 = ssub.s32 %s16, 2
        // Predicated region
        $region53: #{mlp_forward.1} parent=51 // pred_check
          %p753 = pneg %p113
        $region54: #{mlp_forward.1} parent=51 // pred_check_branch
          %755 = sbr.rel (%p753) target = $region56
        $region55: #{mlp_forward.1} parent=51 // pred_region
          %s756 = sand.u32 %s98, 1
          %s757 = scalar_lea.sflag [#allocation4], %s756
          %s758 = sand.u32 %s98, 1
          %s759 = smul.addr %s758, 128
          %s760 = scalar_lea.vmem [#allocation8], %s759
          %761 = dma.done %s757, 2048
        $region56: #{mlp_forward.1} parent=51 // pred_fallthru
          _
      $region52: #{mlp_forward.1} parent=5 // pred_fallthru
        _
    $region6: #{mlp_forward.1} parent=1 // loop_footer
      %s20 = sadd.s32 1, %s16
    $region7: #{mlp_forward.1} parent=1 // loop_footer_branch
      %15 = sbr.rel target = $region3
    $region8: #{mlp_forward.1} parent=1 // loop_exit
      _
    %762 = vsyncpa [#allocation3], 1
    %s763 = scalar_lea.sflag [#allocation3], 1
    %764 = vsyncpa %s763, 1
    %765 = vsyncpa [#allocation6], 1
    %766 = vsyncpa [#allocation4], 1
    %s767 = scalar_lea.sflag [#allocation4], 1
    %768 = vsyncpa %s767, 1

</llo_original>
